<compile_context>
chip_gen: v6e
topology: v6e:2x2x1
jax: 0.10.0
libtpu: 0.0.40
codegen_flags: <defaults>
</compile_context>

<pallas_src>
import jax
import jax.numpy as jnp
from jax.experimental import pallas as pl
from jax.experimental.pallas import tpu as pltpu

IN_DIM, HID_DIM, OUT_DIM = 128, 256, 128   # module defaults (residual requires in == out)


def resblock_kernel(x_ref, w1_ref, b1_ref, w2_ref, b2_ref, o_ref):
    # bf16 operand for MXU matmul #1; the f32 residual is re-read from the pipelined
    # input buffer in the epilogue instead of being held live across both matmuls.
    xb = x_ref[...].astype(jnp.bfloat16)                                    # (tb, in)
    h = jnp.dot(xb, w1_ref[...], preferred_element_type=jnp.float32)       # (tb, hid)
    h = jnp.maximum(h + b1_ref[...], 0.0)                                   # bias + ReLU (VPU)
    # Dropout(0.2): inference-mode identity (matches module.eval()).
    # TODO(synk): training-mode dropout would need pltpu.prng_seed + prng_random_bits
    #             (per-grid-step seed) and a 1/(1-p) = 1.25 rescale.
    y = jnp.dot(h.astype(jnp.bfloat16), w2_ref[...],
                preferred_element_type=jnp.float32)                         # (tb, out)
    o_ref[...] = (y + b2_ref[...] + x_ref[...]).astype(o_ref.dtype)         # residual add


def _round_up(n, m):
    return ((n + m - 1) // m) * m


def _vmem_budget_bytes(tb, out_itemsize):
    # Double-buffered x / out tiles + in-kernel temporaries + resident weights + margin.
    in_bytes = 2 * tb * IN_DIM * 4
    out_bytes = 2 * tb * OUT_DIM * out_itemsize
    tmp_bytes = tb * HID_DIM * 4 + tb * (IN_DIM + HID_DIM) * 2   # h (f32) + bf16 casts
    w_bytes = 2 * ((IN_DIM * HID_DIM + HID_DIM * OUT_DIM) * 2 + (HID_DIM + OUT_DIM) * 4)
    margin = 4 * 1024 * 1024
    return in_bytes + out_bytes + tmp_bytes + w_bytes + margin


def resblock_forward(x, w1, b1, w2, b2, *, tb=4096, out_dtype=None):
    """x: (B, IN_DIM) f32. w1: (IN, HID) bf16, b1: (1, HID) f32, w2: (HID, OUT) bf16,
    b2: (1, OUT) f32. out_dtype defaults to x.dtype; pass jnp.bfloat16 to halve the
    HBM write traffic if downstream consumers tolerate a bf16 residual output."""
    B, D = x.shape
    assert D == IN_DIM
    out_dtype = x.dtype if out_dtype is None else out_dtype

    # Large tile amortizes grid-step overhead (mem-bound kernel), but keep >=2 grid
    # steps so the "parallel" batch axis can use both TensorCores on v7x.
    tb = max(8, min(_round_up(tb, 8), _round_up(pl.cdiv(B, 2), 8)))
    grid = (pl.cdiv(B, tb),)   # no host-side padding: Pallas masks the partial edge block

    out_itemsize = jnp.dtype(out_dtype).itemsize
    vmem_limit = min(48 * 1024 * 1024, max(16 * 1024 * 1024, _vmem_budget_bytes(tb, out_itemsize)))

    weight_bytes = (IN_DIM * HID_DIM + HID_DIM * OUT_DIM) * 2 + (HID_DIM + OUT_DIM) * 4
    cost = pl.CostEstimate(
        flops=2 * B * IN_DIM * HID_DIM + 2 * B * HID_DIM * OUT_DIM,
        transcendentals=0,
        bytes_accessed=B * IN_DIM * 4 + B * OUT_DIM * out_itemsize + weight_bytes,
    )

    out = pl.pallas_call(
        resblock_kernel,
        out_shape=jax.ShapeDtypeStruct((B, OUT_DIM), out_dtype),
        grid_spec=pltpu.PrefetchScalarGridSpec(
            num_scalar_prefetch=0,
            grid=grid,
            in_specs=[
                pl.BlockSpec((tb, IN_DIM), lambda i: (i, 0)),          # x tile (pipelined)
                # Grid-invariant operands: constant index_map -> fetched once, kept
                # resident in VMEM (revisit optimization elides per-step re-DMA).
                pl.BlockSpec((IN_DIM, HID_DIM), lambda i: (0, 0)),     # W1
                pl.BlockSpec((1, HID_DIM), lambda i: (0, 0)),          # b1
                pl.BlockSpec((HID_DIM, OUT_DIM), lambda i: (0, 0)),    # W2
                pl.BlockSpec((1, OUT_DIM), lambda i: (0, 0)),          # b2
            ],
            out_specs=pl.BlockSpec((tb, OUT_DIM), lambda i: (i, 0)),
        ),
        compiler_params=pltpu.CompilerParams(
            dimension_semantics=("parallel",),   # megacore-shard the batch axis (v7x 2 TCs)
            vmem_limit_bytes=vmem_limit,         # sized from buffers; never the full 64 MiB of v7x
        ),
        cost_estimate=cost,
    )(x, w1, b1, w2, b2)
    return out


def init_params(key):
    # Deterministic synthetic init (PyTorch-style uniform fan_in bounds).
    k1, k2, k3, k4 = jax.random.split(key, 4)
    bound1 = 1.0 / (IN_DIM ** 0.5)
    bound2 = 1.0 / (HID_DIM ** 0.5)
    w1 = jax.random.uniform(k1, (IN_DIM, HID_DIM), jnp.float32, -bound1, bound1)
    b1 = jax.random.uniform(k2, (1, HID_DIM), jnp.float32, -bound1, bound1)
    w2 = jax.random.uniform(k3, (HID_DIM, OUT_DIM), jnp.float32, -bound2, bound2)
    b2 = jax.random.uniform(k4, (1, OUT_DIM), jnp.float32, -bound2, bound2)
    # Matmul operands live in bf16 (full-rate MXU); biases stay f32 for the epilogue.
    return w1.astype(jnp.bfloat16), b1, w2.astype(jnp.bfloat16), b2


if __name__ == "__main__":
    key = jax.random.PRNGKey(0)
    kx, kp = jax.random.split(key)
    B = 68                                    # small, deliberately NOT a multiple of 8
    x = jax.random.normal(kx, (B, IN_DIM), jnp.float32)
    w1, b1, w2, b2 = init_params(kp)

    out = resblock_forward(x, w1, b1, w2, b2)
    jax.block_until_ready(out)

    # Pure-JAX reference with the same bf16-operand / f32-accumulate math
    # (eval-mode dropout = identity).
    h = jnp.maximum(
        jnp.dot(x.astype(jnp.bfloat16), w1, preferred_element_type=jnp.float32) + b1, 0.0)
    ref = jnp.dot(h.astype(jnp.bfloat16), w2, preferred_element_type=jnp.float32) + b2 + x

    assert out.shape == (B, OUT_DIM)
    assert jnp.allclose(out, ref, atol=2e-2, rtol=2e-2)
    print("KERNEL_OK")
</pallas_src>

<mosaic_0001>
module attributes {stable_mosaic.version = 11 : i64} {
  func.func @resblock_kernel(%arg0: i32, %arg1: memref<40x128xf32, #tpu.memory_space<vmem>>, %arg2: memref<128x256xbf16, #tpu.memory_space<vmem>>, %arg3: memref<1x256xf32, #tpu.memory_space<vmem>>, %arg4: memref<256x128xbf16, #tpu.memory_space<vmem>>, %arg5: memref<1x128xf32, #tpu.memory_space<vmem>>, %arg6: memref<40x128xf32, #tpu.memory_space<vmem>>) attributes {dimension_semantics = [#tpu.dimension_semantics<parallel>], iteration_bounds = array<i64: 2>, scalar_prefetch = 0 : i64, scratch_operands = 0 : i64, tpu.core_type = #tpu.core_type<tc>, window_params = [{transform_indices = @transform_0, window_bounds = array<i64: 40, 128>}, {pipeline_mode = #tpu.pipeline_mode<synchronous>, transform_indices = @transform_1, window_bounds = array<i64: 128, 256>}, {pipeline_mode = #tpu.pipeline_mode<synchronous>, transform_indices = @transform_2, window_bounds = array<i64: 1, 256>}, {pipeline_mode = #tpu.pipeline_mode<synchronous>, transform_indices = @transform_3, window_bounds = array<i64: 256, 128>}, {pipeline_mode = #tpu.pipeline_mode<synchronous>, transform_indices = @transform_4, window_bounds = array<i64: 1, 128>}, {transform_indices = @transform_5, window_bounds = array<i64: 40, 128>}]} {
    %c0 = arith.constant 0 : index
    %c0_0 = arith.constant 0 : index
    %0 = vector.load %arg1[%c0, %c0_0] : memref<40x128xf32, #tpu.memory_space<vmem>>, vector<40x128xf32>
    %1 = arith.truncf %0 : vector<40x128xf32> to vector<40x128xbf16>
    %c0_1 = arith.constant 0 : index
    %c0_2 = arith.constant 0 : index
    %2 = vector.load %arg2[%c0_1, %c0_2] : memref<128x256xbf16, #tpu.memory_space<vmem>>, vector<128x256xbf16>
    %cst = arith.constant dense<0.000000e+00> : vector<40x256xf32>
    %3 = tpu.matmul %1, %2, %cst {dimension_numbers = #tpu.dot_dimension_numbers<[1], [0], [0], [1], [0, 0, 1, 1], [], []>} : vector<40x128xbf16>, vector<128x256xbf16>, vector<40x256xf32> -> vector<40x256xf32>
    %c0_3 = arith.constant 0 : index
    %c0_4 = arith.constant 0 : index
    %4 = vector.load %arg3[%c0_3, %c0_4] : memref<1x256xf32, #tpu.memory_space<vmem>>, vector<1x256xf32>
    %5 = vector.broadcast %4 : vector<1x256xf32> to vector<40x256xf32>
    %6 = arith.addf %3, %5 : vector<40x256xf32>
    %cst_5 = arith.constant 0.000000e+00 : f32
    %7 = vector.broadcast %cst_5 : f32 to vector<40x256xf32>
    %8 = arith.maximumf %6, %7 : vector<40x256xf32>
    %9 = arith.truncf %8 : vector<40x256xf32> to vector<40x256xbf16>
    %c0_6 = arith.constant 0 : index
    %c0_7 = arith.constant 0 : index
    %10 = vector.load %arg4[%c0_6, %c0_7] : memref<256x128xbf16, #tpu.memory_space<vmem>>, vector<256x128xbf16>
    %cst_8 = arith.constant dense<0.000000e+00> : vector<40x128xf32>
    %11 = tpu.matmul %9, %10, %cst_8 {dimension_numbers = #tpu.dot_dimension_numbers<[1], [0], [0], [1], [0, 0, 1, 1], [], []>} : vector<40x256xbf16>, vector<256x128xbf16>, vector<40x128xf32> -> vector<40x128xf32>
    %c0_9 = arith.constant 0 : index
    %c0_10 = arith.constant 0 : index
    %12 = vector.load %arg5[%c0_9, %c0_10] : memref<1x128xf32, #tpu.memory_space<vmem>>, vector<1x128xf32>
    %13 = vector.broadcast %12 : vector<1x128xf32> to vector<40x128xf32>
    %14 = arith.addf %11, %13 : vector<40x128xf32>
    %c0_11 = arith.constant 0 : index
    %c0_12 = arith.constant 0 : index
    %15 = vector.load %arg1[%c0_11, %c0_12] : memref<40x128xf32, #tpu.memory_space<vmem>>, vector<40x128xf32>
    %16 = arith.addf %14, %15 : vector<40x128xf32>
    %c0_13 = arith.constant 0 : index
    %c0_14 = arith.constant 0 : index
    %17 = vector.load %arg6[%c0_13, %c0_14] : memref<40x128xf32, #tpu.memory_space<vmem>>, vector<40x128xf32>
    tpu.vector_store %arg6[%c0_13, %c0_14], %16 {strides = array<i32>} : memref<40x128xf32, #tpu.memory_space<vmem>>, vector<40x128xf32>,
    return
  }
  func.func @transform_0(%arg0: i32) -> (i32, i32) {
    %c0_i32 = arith.constant 0 : i32
    %c0_i32_0 = arith.constant 0 : i32
    return %arg0, %c0_i32 : i32, i32
  }
  func.func @transform_1(%arg0: i32) -> (i32, i32) {
    %c0_i32 = arith.constant 0 : i32
    %c0_i32_0 = arith.constant 0 : i32
    %c0_i32_1 = arith.constant 0 : i32
    return %c0_i32, %c0_i32_0 : i32, i32
  }
  func.func @transform_2(%arg0: i32) -> (i32, i32) {
    %c0_i32 = arith.constant 0 : i32
    %c0_i32_0 = arith.constant 0 : i32
    %c0_i32_1 = arith.constant 0 : i32
    return %c0_i32, %c0_i32_0 : i32, i32
  }
  func.func @transform_3(%arg0: i32) -> (i32, i32) {
    %c0_i32 = arith.constant 0 : i32
    %c0_i32_0 = arith.constant 0 : i32
    %c0_i32_1 = arith.constant 0 : i32
    return %c0_i32, %c0_i32_0 : i32, i32
  }
  func.func @transform_4(%arg0: i32) -> (i32, i32) {
    %c0_i32 = arith.constant 0 : i32
    %c0_i32_0 = arith.constant 0 : i32
    %c0_i32_1 = arith.constant 0 : i32
    return %c0_i32, %c0_i32_0 : i32, i32
  }
  func.func @transform_5(%arg0: i32) -> (i32, i32) {
    %c0_i32 = arith.constant 0 : i32
    %c0_i32_0 = arith.constant 0 : i32
    return %arg0, %c0_i32 : i32, i32
  }
}

</mosaic_0001>

<llo_original>
// kernel: tpu_custom_call.1
$region0: #{tpu_custom_call.1}
  #allocation0 [shape = 'u32[]', space=smem, size = 0x4, offset = 0x4, fixed_abs, tag = 'smem constant byte address 0x4 - core index']
  #allocation1 [shape = 'u32[144,128]{1,0:T(1,128)}', space=vmem, size = 0x12000, scoped, tag = 'internal scratch']
  %s0 = inlined_call_operand.hbm [shape: f32[68,128], index: 0, kind: input, shape index: {}]
  %s1 = inlined_call_operand.hbm [shape: bf16[128,256], index: 1, kind: input, shape index: {}]
  %s2 = inlined_call_operand.vmem [shape: f32[1,256], index: 2, kind: input, shape index: {}]
  %s3 = inlined_call_operand.hbm [shape: bf16[256,128], index: 3, kind: input, shape index: {}]
  %s4 = inlined_call_operand.vmem [shape: f32[1,128], index: 4, kind: input, shape index: {}]
  %s5 = inlined_call_operand.hbm [shape: f32[68,128], index: 5, kind: output, shape index: {}]
  %s6 = sld [smem:[#allocation0]]
  $region65: #{tpu_custom_call.1} parent=0
    _
  %s8 = ssub.s32 1, %s6
  %s9 = scalar_select 0, %s8, %s6
  $region1: #{tpu_custom_call.1} parent=0
    #allocation2 [shape = 'u8[40960]{0}', space=vmem, size = 0xa000, scoped, tag = 'input window, operand 0']
    #allocation3 [shape = 's32[2]{0}', space=sflag, size = 0x8, scoped, tag = 'scoped memory for tpu_custom_call.1']
    #allocation4 [shape = 's32[2]{0}', space=sflag, size = 0x8, scoped, tag = 'scoped memory for tpu_custom_call.1']
    #allocation5 [shape = 'u8[65536]{0}', space=vmem, size = 0x10000, scoped, tag = 'input window, operand 1, single buffered']
    #allocation6 [shape = 's32[1]{0}', space=sflag, size = 0x4, scoped, tag = 'scoped memory for tpu_custom_call.1']
    #allocation7 [shape = 'u8[65536]{0}', space=vmem, size = 0x10000, scoped, tag = 'input window, operand 3, single buffered']
    #allocation8 [shape = 'u8[40960]{0}', space=vmem, size = 0xa000, scoped, tag = 'output window, operand 0']
    %10 = vsyncpa [#allocation3], 0
    %s11 = scalar_lea.sflag [#allocation3], 1
    %12 = vsyncpa %s11, 0
    %13 = vsyncpa [#allocation6], 0
    %14 = vsyncpa [#allocation4], 0
    %s15 = scalar_lea.sflag [#allocation4], 1
    %16 = vsyncpa %s15, 0
    loop: start=0, step=1, limit=4
    $region2: #{tpu_custom_call.1} parent=1 // loop_pre_header
      _
    $region3: #{tpu_custom_call.1} parent=1 // loop_header
      %s18 = sphi 0, %s22
      %p19 = scmp.ge.s32.totalorder %s18, 4
      %s28 = sphi 0, %s30
      %s31 = sphi 0, %s28
      %s32 = sphi 0, %s31
      %s48 = sphi 0, %s32
      %s52 = sphi 0, %s52
      %s54 = sphi 0, %s52
      %s55 = sphi 0, %s54
      %s69 = sphi 0, %s55
      %s73 = sphi 0, %s73
      %s75 = sphi 0, %s73
      %s76 = sphi 0, %s75
      %s90 = sphi 0, %s76
      %s94 = sphi 0, %s94
      %s96 = sphi 0, %s94
      %s97 = sphi 0, %s96
      %s111 = sphi 0, %s97
      %s115 = sphi 0, %s115
      %s117 = sphi 0, %s115
      %s118 = sphi 0, %s117
      %s132 = sphi 0, %s118
      %s138 = sphi 0, %s140
      %s141 = sphi 0, %s138
      %s142 = sphi 0, %s141
      %s158 = sphi 0, %s142
    $region4: #{tpu_custom_call.1} parent=1 // loop_header_branch
      %21 = sbr.rel (%p19) target = $region8
    $region5: #{tpu_custom_call.1} parent=1 // loop_body
      %s23 = ssub.s32 %s18, 1
      %s24 = ssub.s32 %s18, 2
      %s25 = sadd.s32 %s18, 1
      %s26 = ssub.s32 %s18, %s25
      %p27 = scmp.eq.s32.totalorder %s26, 0
      %s29 = sadd.s32 %s28, 1
      %s30 = scalar_select %p27, %s28, %s29
      %p33 = pneg %p27
      %p34 = scmp.eq.s32.totalorder %s18, 1
      %p35 = por %p33, %p34
      %p36 = scmp.ne.s32.totalorder %s28, %s31
      %p37 = scmp.eq.s32.totalorder %s18, 0
      %p38 = por %p36, %p37
      %p39 = scmp.ne.s32.totalorder %s28, %s31
      %p40 = scmp.eq.s32.totalorder %s23, 1
      %p41 = por %p39, %p40
      %p42 = scmp.ne.s32.totalorder %s31, %s32
      %p43 = scmp.eq.s32.totalorder %s23, 0
      %p44 = por %p42, %p43
      %p45 = scmp.ne.s32.totalorder %s31, %s32
      %p46 = scmp.eq.s32.totalorder %s24, 1
      %p47 = por %p45, %p46
      %p49 = scmp.ne.s32.totalorder %s32, %s48
      %p50 = scmp.eq.s32.totalorder %s24, 0
      %p51 = por %p49, %p50
      %s53 = sadd.s32 %s52, 1
      %p56 = scmp.eq.s32.totalorder %s18, 1
      %p57 = scmp.ne.s32.totalorder %s52, %s54
      %p58 = scmp.eq.s32.totalorder %s18, 0
      %p59 = por %p57, %p58
      %p60 = scmp.ne.s32.totalorder %s52, %s54
      %p61 = scmp.eq.s32.totalorder %s23, 1
      %p62 = por %p60, %p61
      %p63 = scmp.ne.s32.totalorder %s54, %s55
      %p64 = scmp.eq.s32.totalorder %s23, 0
      %p65 = por %p63, %p64
      %p66 = scmp.ne.s32.totalorder %s54, %s55
      %p67 = scmp.eq.s32.totalorder %s24, 1
      %p68 = por %p66, %p67
      %p70 = scmp.ne.s32.totalorder %s55, %s69
      %p71 = scmp.eq.s32.totalorder %s24, 0
      %p72 = por %p70, %p71
      %s74 = sadd.s32 %s73, 1
      %p77 = scmp.eq.s32.totalorder %s18, 1
      %p78 = scmp.ne.s32.totalorder %s73, %s75
      %p79 = scmp.eq.s32.totalorder %s18, 0
      %p80 = por %p78, %p79
      %p81 = scmp.ne.s32.totalorder %s73, %s75
      %p82 = scmp.eq.s32.totalorder %s23, 1
      %p83 = por %p81, %p82
      %p84 = scmp.ne.s32.totalorder %s75, %s76
      %p85 = scmp.eq.s32.totalorder %s23, 0
      %p86 = por %p84, %p85
      %p87 = scmp.ne.s32.totalorder %s75, %s76
      %p88 = scmp.eq.s32.totalorder %s24, 1
      %p89 = por %p87, %p88
      %p91 = scmp.ne.s32.totalorder %s76, %s90
      %p92 = scmp.eq.s32.totalorder %s24, 0
      %p93 = por %p91, %p92
      %s95 = sadd.s32 %s94, 1
      %p98 = scmp.eq.s32.totalorder %s18, 1
      %p99 = scmp.ne.s32.totalorder %s94, %s96
      %p100 = scmp.eq.s32.totalorder %s18, 0
      %p101 = por %p99, %p100
      %p102 = scmp.ne.s32.totalorder %s94, %s96
      %p103 = scmp.eq.s32.totalorder %s23, 1
      %p104 = por %p102, %p103
      %p105 = scmp.ne.s32.totalorder %s96, %s97
      %p106 = scmp.eq.s32.totalorder %s23, 0
      %p107 = por %p105, %p106
      %p108 = scmp.ne.s32.totalorder %s96, %s97
      %p109 = scmp.eq.s32.totalorder %s24, 1
      %p110 = por %p108, %p109
      %p112 = scmp.ne.s32.totalorder %s97, %s111
      %p113 = scmp.eq.s32.totalorder %s24, 0
      %p114 = por %p112, %p113
      %s116 = sadd.s32 %s115, 1
      %p119 = scmp.eq.s32.totalorder %s18, 1
      %p120 = scmp.ne.s32.totalorder %s115, %s117
      %p121 = scmp.eq.s32.totalorder %s18, 0
      %p122 = por %p120, %p121
      %p123 = scmp.ne.s32.totalorder %s115, %s117
      %p124 = scmp.eq.s32.totalorder %s23, 1
      %p125 = por %p123, %p124
      %p126 = scmp.ne.s32.totalorder %s117, %s118
      %p127 = scmp.eq.s32.totalorder %s23, 0
      %p128 = por %p126, %p127
      %p129 = scmp.ne.s32.totalorder %s117, %s118
      %p130 = scmp.eq.s32.totalorder %s24, 1
      %p131 = por %p129, %p130
      %p133 = scmp.ne.s32.totalorder %s118, %s132
      %p134 = scmp.eq.s32.totalorder %s24, 0
      %p135 = por %p133, %p134
      %s136 = ssub.s32 %s18, %s25
      %p137 = scmp.eq.s32.totalorder %s136, 0
      %s139 = sadd.s32 %s138, 1
      %s140 = scalar_select %p137, %s138, %s139
      %p143 = pneg %p137
      %p144 = scmp.eq.s32.totalorder %s18, 1
      %p145 = por %p143, %p144
      %p146 = scmp.ne.s32.totalorder %s138, %s141
      %p147 = scmp.eq.s32.totalorder %s18, 0
      %p148 = por %p146, %p147
      %p149 = scmp.ne.s32.totalorder %s138, %s141
      %p150 = scmp.eq.s32.totalorder %s23, 1
      %p151 = por %p149, %p150
      %p152 = scmp.ne.s32.totalorder %s141, %s142
      %p153 = scmp.eq.s32.totalorder %s23, 0
      %p154 = por %p152, %p153
      %p155 = scmp.ne.s32.totalorder %s141, %s142
      %p156 = scmp.eq.s32.totalorder %s24, 1
      %p157 = por %p155, %p156
      %p159 = scmp.ne.s32.totalorder %s142, %s158
      %p160 = scmp.eq.s32.totalorder %s24, 0
      %p161 = por %p159, %p160
      %p162 = scmp.le.s32.totalorder 1, %s18
      %p163 = scmp.lt.s32.totalorder %s18, 3
      %p164 = pnand %p162, %p163
      %p165 = pneg %p164
      // Predicated region
      $region9: #{tpu_custom_call.1} parent=5 // pred_check
        _
      $region10: #{tpu_custom_call.1} parent=5 // pred_check_branch
        %167 = sbr.rel (%p164) target = $region12
      $region11: #{tpu_custom_call.1} parent=5 // pred_region
        %s168 = ssub.s32 %s18, 1
        // Predicated region
        $region13: #{tpu_custom_call.1} parent=11 // pred_check
          %p169 = pneg %p65
        $region14: #{tpu_custom_call.1} parent=11 // pred_check_branch
          %171 = sbr.rel (%p169) target = $region16
        $region15: #{tpu_custom_call.1} parent=11 // pred_region
          %s173 = ssub.s32 2048, 2048
          %174 = vsyncadd [#allocation6], %s173
          %s175 = sshll.u32 [#allocation5], 4
          %s176 = int_to_ptr.vmem [resolvable:$true] %s175
          %181 = dma.hbm_to_vmem [thread:$0]  %s1, 2048, %s176, [#allocation6], 128, 128, 8
        $region16: #{tpu_custom_call.1} parent=11 // pred_fallthru
          _
        // Predicated region
        $region17: #{tpu_custom_call.1} parent=11 // pred_check
          %p182 = pneg %p86
        $region18: #{tpu_custom_call.1} parent=11 // pred_check_branch
          %184 = sbr.rel (%p182) target = $region20
        $region19: #{tpu_custom_call.1} parent=11 // pred_region
          _
        $region20: #{tpu_custom_call.1} parent=11 // pred_fallthru
          _
        // Predicated region
        $region21: #{tpu_custom_call.1} parent=11 // pred_check
          %p185 = pneg %p107
        $region22: #{tpu_custom_call.1} parent=11 // pred_check_branch
          %187 = sbr.rel (%p185) target = $region24
        $region23: #{tpu_custom_call.1} parent=11 // pred_region
          %s189 = ssub.s32 2048, 2048
          %190 = vsyncadd [#allocation6], %s189
          %s191 = sshll.u32 [#allocation7], 4
          %s192 = int_to_ptr.vmem [resolvable:$true] %s191
          %197 = dma.hbm_to_vmem [thread:$0]  %s3, 2048, %s192, [#allocation6], 64, 64, 4
        $region24: #{tpu_custom_call.1} parent=11 // pred_fallthru
          _
        // Predicated region
        $region25: #{tpu_custom_call.1} parent=11 // pred_check
          %p198 = pneg %p128
        $region26: #{tpu_custom_call.1} parent=11 // pred_check_branch
          %200 = sbr.rel (%p198) target = $region28
        $region27: #{tpu_custom_call.1} parent=11 // pred_region
          _
        $region28: #{tpu_custom_call.1} parent=11 // pred_fallthru
          _
      $region12: #{tpu_custom_call.1} parent=5 // pred_fallthru
        _
      %p201 = scmp.lt.s32.totalorder %s18, 2
      // Predicated region
      $region29: #{tpu_custom_call.1} parent=5 // pred_check
        %p202 = pneg %p201
      $region30: #{tpu_custom_call.1} parent=5 // pred_check_branch
        %204 = sbr.rel (%p202) target = $region32
      $region31: #{tpu_custom_call.1} parent=5 // pred_region
        // Predicated region
        $region33: #{tpu_custom_call.1} parent=31 // pred_check
          %p205 = pneg %p38
        $region34: #{tpu_custom_call.1} parent=31 // pred_check_branch
          %207 = sbr.rel (%p205) target = $region36
        $region35: #{tpu_custom_call.1} parent=31 // pred_region
          %s208 = sand.u32 %s28, 1
          %s209 = scalar_lea.sflag [#allocation3], %s208
          %s210 = sand.u32 %s28, 1
          %s211 = smul.addr %s210, 40
          %s212 = scalar_lea.vmem [#allocation2], %s211
          %s213 = smul.u32 5, %s18
          %s214 = ssub.s32 9, %s213
          %p215 = scmp.lt.s32.totalorder %s214, 5
          %s216 = scalar_select %p215, %s214, 5
          %s217 = smul.u32 128, %s216
          %s219 = ssub.s32 640, %s217
          %220 = vsyncadd %s209, %s219
          %p221 = scmp.ne.s32.totalorder 0, %s217
          %s222 = smul.addr %s213, 128
          %s223 = scalar_lea.hbm %s0, %s222
          %s224 = smul.u32 8, %s216
          %s225 = sshll.u32 %s212, 4
          %s226 = int_to_ptr.vmem [resolvable:$true] %s225
          %s227 = sshll.u32 %s224, 4
          %231 = dma.hbm_to_vmem [thread:$0]  (%p221), %s223, %s227, %s226, %s209, 128, 128, 8
        $region36: #{tpu_custom_call.1} parent=31 // pred_fallthru
          _
      $region32: #{tpu_custom_call.1} parent=5 // pred_fallthru
        _
      %p232 = scmp.le.s32.totalorder 1, %s18
      %p233 = scmp.lt.s32.totalorder %s18, 3
      %p234 = pnand %p232, %p233
      %p235 = pneg %p234
      // Predicated region
      $region37: #{tpu_custom_call.1} parent=5 // pred_check
        _
      $region38: #{tpu_custom_call.1} parent=5 // pred_check_branch
        %237 = sbr.rel (%p234) target = $region40
      $region39: #{tpu_custom_call.1} parent=5 // pred_region
        %s238 = ssub.s32 %s18, 1
        %s239 = sand.u32 %s31, 1
        %s240 = scalar_lea.sflag [#allocation3], %s239
        %s241 = sand.u32 %s31, 1
        %s242 = smul.addr %s241, 40
        %s243 = scalar_lea.vmem [#allocation2], %s242
        // Predicated region
        $region41: #{tpu_custom_call.1} parent=39 // pred_check
          %p244 = pneg %p44
        $region42: #{tpu_custom_call.1} parent=39 // pred_check_branch
          %246 = sbr.rel (%p244) target = $region44
        $region43: #{tpu_custom_call.1} parent=39 // pred_region
          %247 = dma.done %s240, 640
        $region44: #{tpu_custom_call.1} parent=39 // pred_fallthru
          _
        // Predicated region
        $region45: #{tpu_custom_call.1} parent=39 // pred_check
          %p248 = pneg %p65
        $region46: #{tpu_custom_call.1} parent=39 // pred_check_branch
          %250 = sbr.rel (%p248) target = $region48
        $region47: #{tpu_custom_call.1} parent=39 // pred_region
          %251 = dma.done [#allocation6], 2048
        $region48: #{tpu_custom_call.1} parent=39 // pred_fallthru
          _
        // Predicated region
        $region49: #{tpu_custom_call.1} parent=39 // pred_check
          %p252 = pneg %p107
        $region50: #{tpu_custom_call.1} parent=39 // pred_check_branch
          %254 = sbr.rel (%p252) target = $region52
        $region51: #{tpu_custom_call.1} parent=39 // pred_region
          %255 = dma.done [#allocation6], 2048
        $region52: #{tpu_custom_call.1} parent=39 // pred_fallthru
          _
        %s256 = sand.u32 %s31, 1
        %s257 = scalar_lea.sflag [#allocation3], %s256
        %s258 = sand.u32 %s31, 1
        %s259 = smul.addr %s258, 40
        %s260 = scalar_lea.vmem [#allocation2], %s259
        %p261 = pneg %p44
        %p262 = pneg %p41
        %p263 = pneg %p65
        %p264 = pneg %p62
        %p265 = pneg %p86
        %p266 = pneg %p83
        %p267 = pneg %p107
        %p268 = pneg %p104
        %p269 = pneg %p128
        %p270 = pneg %p125
        %p271 = pneg %p154
        %p272 = pneg %p151
        %s273 = sand.u32 %s141, 1
        %s274 = scalar_lea.sflag [#allocation4], %s273
        %s275 = sand.u32 %s141, 1
        %s276 = smul.addr %s275, 40
        %s277 = scalar_lea.vmem [#allocation8], %s276
        %s278 = smul.u32 5, %s23
        %s279 = ssub.s32 9, %s278
        %p280 = scmp.lt.s32.totalorder %s279, 5
        %s281 = scalar_select %p280, %s279, 5
        %s282 = smul.u32 128, %s281
        %s283 = smul.u32 5, %s23
        %s284 = ssub.s32 9, %s283
        %p285 = scmp.lt.s32.totalorder %s284, 5
        %s286 = scalar_select %p285, %s284, 5
        %s287 = smul.u32 128, %s286
        %v289 = vld [vmem:[%s243] sm:$0xff]
        %v290 = vld [vmem:[%s243 + $0x8] sm:$0xff]
        %v291 = vld [vmem:[%s243 + $0x10] sm:$0xff]
        %v292 = vld [vmem:[%s243 + $0x18] sm:$0xff]
        %v293 = vld [vmem:[%s243 + $0x20] sm:$0xff]
        %v294 = vpack.c.bf16 %v290, %v289
        %v295 = vpack.c.bf16 %v292, %v291
        %v296 = vpack.c.bf16 %v293, %v293
        %v297 = vld [vmem:[#allocation5] sm:$0xff]
        %v298 = vld [vmem:[#allocation5 + $0x8] sm:$0xff]
        %v299 = vld [vmem:[#allocation5 + $0x10] sm:$0xff]
        %v300 = vld [vmem:[#allocation5 + $0x18] sm:$0xff]
        %v301 = vld [vmem:[#allocation5 + $0x20] sm:$0xff]
        %v302 = vld [vmem:[#allocation5 + $0x28] sm:$0xff]
        %v303 = vld [vmem:[#allocation5 + $0x30] sm:$0xff]
        %v304 = vld [vmem:[#allocation5 + $0x38] sm:$0xff]
        %v305 = vld [vmem:[#allocation5 + $0x40] sm:$0xff]
        %v306 = vld [vmem:[#allocation5 + $0x48] sm:$0xff]
        %v307 = vld [vmem:[#allocation5 + $0x50] sm:$0xff]
        %v308 = vld [vmem:[#allocation5 + $0x58] sm:$0xff]
        %v309 = vld [vmem:[#allocation5 + $0x60] sm:$0xff]
        %v310 = vld [vmem:[#allocation5 + $0x68] sm:$0xff]
        %v311 = vld [vmem:[#allocation5 + $0x70] sm:$0xff]
        %v312 = vld [vmem:[#allocation5 + $0x78] sm:$0xff]
        %v313 = vld [vmem:[%s2] sm:$0x3]
        %v315 = vlaneseq
        %v316 = vshrl.u32 %v315, 7
        %v317 = vsub.s32 0, %v316
        %v318 = vrot.slane %v313, %v317
        %v319 = vlaneseq
        %v320 = vshrl.u32 %v319, 7
        %v321 = vsub.s32 1, %v320
        %v322 = vrot.slane %v313, %v321
        %v341 = vunpack.c.l.b16 %v297
        %v342 = vunpack.c.h.b16 %v297
        %v343 = vunpack.c.l.b16 %v298
        %v344 = vunpack.c.h.b16 %v298
        %v345 = vunpack.c.l.b16 %v299
        %v346 = vunpack.c.h.b16 %v299
        %v347 = vunpack.c.l.b16 %v300
        %v348 = vunpack.c.h.b16 %v300
        %v349 = vunpack.c.l.b16 %v301
        %v350 = vunpack.c.h.b16 %v301
        %v351 = vunpack.c.l.b16 %v302
        %v352 = vunpack.c.h.b16 %v302
        %v353 = vunpack.c.l.b16 %v303
        %v354 = vunpack.c.h.b16 %v303
        %v355 = vunpack.c.l.b16 %v304
        %v356 = vunpack.c.h.b16 %v304
        %v357 = vunpack.c.l.b16 %v305
        %v358 = vunpack.c.h.b16 %v305
        %v359 = vunpack.c.l.b16 %v306
        %v360 = vunpack.c.h.b16 %v306
        %v361 = vunpack.c.l.b16 %v307
        %v362 = vunpack.c.h.b16 %v307
        %v363 = vunpack.c.l.b16 %v308
        %v364 = vunpack.c.h.b16 %v308
        %v365 = vunpack.c.l.b16 %v309
        %v366 = vunpack.c.h.b16 %v309
        %v367 = vunpack.c.l.b16 %v310
        %v368 = vunpack.c.h.b16 %v310
        %v369 = vunpack.c.l.b16 %v311
        %v370 = vunpack.c.h.b16 %v311
        %v371 = vunpack.c.l.b16 %v312
        %v372 = vunpack.c.h.b16 %v312
        %v373 = vpack.c.b16 %v343, %v341
        %v374 = vpack.c.b16 %v344, %v342
        %v375 = vpack.c.b16 %v347, %v345
        %v376 = vpack.c.b16 %v348, %v346
        %v377 = vpack.c.b16 %v351, %v349
        %v378 = vpack.c.b16 %v352, %v350
        %v379 = vpack.c.b16 %v355, %v353
        %v380 = vpack.c.b16 %v356, %v354
        %v381 = vpack.c.b16 %v359, %v357
        %v382 = vpack.c.b16 %v360, %v358
        %v383 = vpack.c.b16 %v363, %v361
        %v384 = vpack.c.b16 %v364, %v362
        %v385 = vpack.c.b16 %v367, %v365
        %v386 = vpack.c.b16 %v368, %v366
        %v387 = vpack.c.b16 %v371, %v369
        %v388 = vpack.c.b16 %v372, %v370
        %405 = vmatprep.subr.bf16.mxu0 %v388
        %406 = vmatpush1.bf16.msra.mxu0 %v387
        %407 = vmatprep.subr.bf16.mxu0 %v386
        %408 = vmatpush1.bf16.msra.mxu0 %v385
        %409 = vmatprep.subr.bf16.mxu0 %v384
        %410 = vmatpush1.bf16.msra.mxu0 %v383
        %411 = vmatprep.subr.bf16.mxu0 %v382
        %412 = vmatpush1.bf16.msra.mxu0 %v381
        %413 = vmatprep.subr.bf16.mxu0 %v380
        %414 = vmatpush1.bf16.msra.mxu0 %v379
        %415 = vmatprep.subr.bf16.mxu0 %v378
        %416 = vmatpush1.bf16.msra.mxu0 %v377
        %417 = vmatprep.subr.bf16.mxu0 %v376
        %418 = vmatpush1.bf16.msra.mxu0 %v375
        %419 = vmatprep.subr.bf16.mxu0 %v374
        %420 = vmatpush1.bf16.msra.mxu0 %v373
        %421 = vmatprep.subr.bf16.mxu0 0
        %422 = vmatpush2.bf16.msra.mxu0 0
        %423 = vmatprep.subr.bf16.mxu0 0
        %424 = vmatpush2.bf16.msra.mxu0 0
        %425 = vmatprep.subr.bf16.mxu0 0
        %426 = vmatpush2.bf16.msra.mxu0 0
        %427 = vmatprep.subr.bf16.mxu0 0
        %428 = vmatpush2.bf16.msra.mxu0 0
        %429 = vmatprep.subr.bf16.mxu0 0
        %430 = vmatpush2.bf16.msra.mxu0 0
        %431 = vmatprep.subr.bf16.mxu0 0
        %432 = vmatpush2.bf16.msra.mxu0 0
        %433 = vmatprep.subr.bf16.mxu0 0
        %434 = vmatpush2.bf16.msra.mxu0 0
        %435 = vmatprep.subr.bf16.mxu0 0
        %436 = vmatpush2.bf16.msra.mxu0 0
        %437 = vmatprep.mubr.bf16.mxu0 0
        %438 = vmatmul.mubr.bf16.gmra.mxu0 %v294
        %v439 = vpop.f32.mrf.mxu0
        %v440 = vadd.f32 %v318, %v439
        %v441 = vpop.f32.mrf.mxu0
        %v442 = vadd.f32 %v322, %v441
        %v443 = vpop.f32.mrf.mxu0
        %v444 = vadd.f32 %v318, %v443
        %v445 = vpop.f32.mrf.mxu0
        %v446 = vadd.f32 %v322, %v445
        %447 = vmatprep.mubr.bf16.mxu0 0
        %448 = vmatmul.mubr.bf16.gmra.mxu0 %v295
        %v449 = vpop.f32.mrf.mxu0
        %v450 = vadd.f32 %v318, %v449
        %v451 = vpop.f32.mrf.mxu0
        %v452 = vadd.f32 %v322, %v451
        %v453 = vpop.f32.mrf.mxu0
        %v454 = vadd.f32 %v318, %v453
        %v455 = vpop.f32.mrf.mxu0
        %v456 = vadd.f32 %v322, %v455
        %457 = vmatprep.mubr.bf16.mxu0 0
        %458 = vmatmul.mubr.bf16.gmra.mxu0 %v296
        %v459 = vpop.f32.mrf.mxu0
        %v460 = vadd.f32 %v318, %v459
        %v461 = vpop.f32.mrf.mxu0
        %v462 = vadd.f32 %v322, %v461
        %v463 = vpop.f32.mrf.mxu0
        %v464 = vpop.f32.mrf.mxu0
        %465 = vdwg.mxu0
        %v466 = vmax.f32 %v440, 0.0
        %v467 = vmax.f32 %v442, 0.0
        %v468 = vmax.f32 %v444, 0.0
        %v469 = vmax.f32 %v446, 0.0
        %v470 = vmax.f32 %v450, 0.0
        %v471 = vmax.f32 %v452, 0.0
        %v472 = vmax.f32 %v454, 0.0
        %v473 = vmax.f32 %v456, 0.0
        %v474 = vmax.f32 %v460, 0.0
        %v475 = vmax.f32 %v462, 0.0
        %v476 = vpack.c.bf16 %v468, %v466
        %v477 = vpack.c.bf16 %v469, %v467
        %v478 = vpack.c.bf16 %v472, %v470
        %v479 = vpack.c.bf16 %v473, %v471
        %v480 = vpack.c.bf16 %v474, %v474
        %v481 = vpack.c.bf16 %v475, %v475
        %v482 = vld [vmem:[#allocation7] sm:$0xf]
        %v483 = vld [vmem:[#allocation7 + $0x4] sm:$0xf]
        %v484 = vld [vmem:[#allocation7 + $0x8] sm:$0xf]
        %v485 = vld [vmem:[#allocation7 + $0xc] sm:$0xf]
        %v486 = vld [vmem:[#allocation7 + $0x10] sm:$0xf]
        %v487 = vld [vmem:[#allocation7 + $0x14] sm:$0xf]
        %v488 = vld [vmem:[#allocation7 + $0x18] sm:$0xf]
        %v489 = vld [vmem:[#allocation7 + $0x1c] sm:$0xf]
        %v490 = vld [vmem:[#allocation7 + $0x20] sm:$0xf]
        %v491 = vld [vmem:[#allocation7 + $0x24] sm:$0xf]
        %v492 = vld [vmem:[#allocation7 + $0x28] sm:$0xf]
        %v493 = vld [vmem:[#allocation7 + $0x2c] sm:$0xf]
        %v494 = vld [vmem:[#allocation7 + $0x30] sm:$0xf]
        %v495 = vld [vmem:[#allocation7 + $0x34] sm:$0xf]
        %v496 = vld [vmem:[#allocation7 + $0x38] sm:$0xf]
        %v497 = vld [vmem:[#allocation7 + $0x3c] sm:$0xf]
        %v498 = vld [vmem:[#allocation7 + $0x40] sm:$0xf]
        %v499 = vld [vmem:[#allocation7 + $0x44] sm:$0xf]
        %v500 = vld [vmem:[#allocation7 + $0x48] sm:$0xf]
        %v501 = vld [vmem:[#allocation7 + $0x4c] sm:$0xf]
        %v502 = vld [vmem:[#allocation7 + $0x50] sm:$0xf]
        %v503 = vld [vmem:[#allocation7 + $0x54] sm:$0xf]
        %v504 = vld [vmem:[#allocation7 + $0x58] sm:$0xf]
        %v505 = vld [vmem:[#allocation7 + $0x5c] sm:$0xf]
        %v506 = vld [vmem:[#allocation7 + $0x60] sm:$0xf]
        %v507 = vld [vmem:[#allocation7 + $0x64] sm:$0xf]
        %v508 = vld [vmem:[#allocation7 + $0x68] sm:$0xf]
        %v509 = vld [vmem:[#allocation7 + $0x6c] sm:$0xf]
        %v510 = vld [vmem:[#allocation7 + $0x70] sm:$0xf]
        %v511 = vld [vmem:[#allocation7 + $0x74] sm:$0xf]
        %v512 = vld [vmem:[#allocation7 + $0x78] sm:$0xf]
        %v513 = vld [vmem:[#allocation7 + $0x7c] sm:$0xf]
        %v514 = vld [vmem:[%s4] sm:$0x1]
        %v516 = vlaneseq
        %v517 = vshrl.u32 %v516, 7
        %v518 = vsub.s32 0, %v517
        %v519 = vrot.slane %v514, %v518
        %v553 = vunpack.c.l.b16 %v482
        %v554 = vunpack.c.l.b16 %v483
        %v555 = vunpack.c.l.b16 %v484
        %v556 = vunpack.c.l.b16 %v485
        %v557 = vunpack.c.l.b16 %v486
        %v558 = vunpack.c.l.b16 %v487
        %v559 = vunpack.c.l.b16 %v488
        %v560 = vunpack.c.l.b16 %v489
        %v561 = vunpack.c.l.b16 %v490
        %v562 = vunpack.c.l.b16 %v491
        %v563 = vunpack.c.l.b16 %v492
        %v564 = vunpack.c.l.b16 %v493
        %v565 = vunpack.c.l.b16 %v494
        %v566 = vunpack.c.l.b16 %v495
        %v567 = vunpack.c.l.b16 %v496
        %v568 = vunpack.c.l.b16 %v497
        %v569 = vunpack.c.l.b16 %v498
        %v570 = vunpack.c.l.b16 %v499
        %v571 = vunpack.c.l.b16 %v500
        %v572 = vunpack.c.l.b16 %v501
        %v573 = vunpack.c.l.b16 %v502
        %v574 = vunpack.c.l.b16 %v503
        %v575 = vunpack.c.l.b16 %v504
        %v576 = vunpack.c.l.b16 %v505
        %v577 = vunpack.c.l.b16 %v506
        %v578 = vunpack.c.l.b16 %v507
        %v579 = vunpack.c.l.b16 %v508
        %v580 = vunpack.c.l.b16 %v509
        %v581 = vunpack.c.l.b16 %v510
        %v582 = vunpack.c.l.b16 %v511
        %v583 = vunpack.c.l.b16 %v512
        %v584 = vunpack.c.l.b16 %v513
        %v585 = vpack.c.b16 %v554, %v553
        %v586 = vpack.c.b16 %v556, %v555
        %v587 = vpack.c.b16 %v558, %v557
        %v588 = vpack.c.b16 %v560, %v559
        %v589 = vpack.c.b16 %v562, %v561
        %v590 = vpack.c.b16 %v564, %v563
        %v591 = vpack.c.b16 %v566, %v565
        %v592 = vpack.c.b16 %v568, %v567
        %v593 = vpack.c.b16 %v570, %v569
        %v594 = vpack.c.b16 %v572, %v571
        %v595 = vpack.c.b16 %v574, %v573
        %v596 = vpack.c.b16 %v576, %v575
        %v597 = vpack.c.b16 %v578, %v577
        %v598 = vpack.c.b16 %v580, %v579
        %v599 = vpack.c.b16 %v582, %v581
        %v600 = vpack.c.b16 %v584, %v583
        %617 = vmatprep.subr.bf16.mxu0 0
        %618 = vmatpush1.bf16.msra.mxu0 %v592
        %619 = vmatprep.subr.bf16.mxu0 0
        %620 = vmatpush1.bf16.msra.mxu0 %v591
        %621 = vmatprep.subr.bf16.mxu0 0
        %622 = vmatpush1.bf16.msra.mxu0 %v590
        %623 = vmatprep.subr.bf16.mxu0 0
        %624 = vmatpush1.bf16.msra.mxu0 %v589
        %625 = vmatprep.subr.bf16.mxu0 0
        %626 = vmatpush1.bf16.msra.mxu0 %v588
        %627 = vmatprep.subr.bf16.mxu0 0
        %628 = vmatpush1.bf16.msra.mxu0 %v587
        %629 = vmatprep.subr.bf16.mxu0 0
        %630 = vmatpush1.bf16.msra.mxu0 %v586
        %631 = vmatprep.subr.bf16.mxu0 0
        %632 = vmatpush1.bf16.msra.mxu0 %v585
        %633 = vmatprep.subr.bf16.mxu0 0
        %634 = vmatpush2.bf16.msra.mxu0 %v600
        %635 = vmatprep.subr.bf16.mxu0 0
        %636 = vmatpush2.bf16.msra.mxu0 %v599
        %637 = vmatprep.subr.bf16.mxu0 0
        %638 = vmatpush2.bf16.msra.mxu0 %v598
        %639 = vmatprep.subr.bf16.mxu0 0
        %640 = vmatpush2.bf16.msra.mxu0 %v597
        %641 = vmatprep.subr.bf16.mxu0 0
        %642 = vmatpush2.bf16.msra.mxu0 %v596
        %643 = vmatprep.subr.bf16.mxu0 0
        %644 = vmatpush2.bf16.msra.mxu0 %v595
        %645 = vmatprep.subr.bf16.mxu0 0
        %646 = vmatpush2.bf16.msra.mxu0 %v594
        %647 = vmatprep.subr.bf16.mxu0 0
        %648 = vmatpush2.bf16.msra.mxu0 %v593
        %649 = vmatprep.mubr.bf16.mxu0 %v477
        %650 = vmatmul.mubr.bf16.gmra.mxu0 %v476
        %v651 = vpop.f32.mrf.mxu0
        %v652 = vadd.f32 %v519, %v651
        %v653 = vpop.f32.mrf.mxu0
        %v654 = vpop.f32.mrf.mxu0
        %v655 = vadd.f32 %v519, %v654
        %v656 = vpop.f32.mrf.mxu0
        %657 = vmatprep.mubr.bf16.mxu0 %v479
        %658 = vmatmul.mubr.bf16.gmra.mxu0 %v478
        %v659 = vpop.f32.mrf.mxu0
        %v660 = vadd.f32 %v519, %v659
        %v661 = vpop.f32.mrf.mxu0
        %v662 = vpop.f32.mrf.mxu0
        %v663 = vadd.f32 %v519, %v662
        %v664 = vpop.f32.mrf.mxu0
        %665 = vmatprep.mubr.bf16.mxu0 %v481
        %666 = vmatmul.mubr.bf16.gmra.mxu0 %v480
        %v667 = vpop.f32.mrf.mxu0
        %v668 = vadd.f32 %v519, %v667
        %v669 = vpop.f32.mrf.mxu0
        %v670 = vpop.f32.mrf.mxu0
        %v671 = vpop.f32.mrf.mxu0
        %672 = vdwg.mxu0
        %v673 = vadd.f32 %v652, %v289
        %v674 = vadd.f32 %v655, %v290
        %v675 = vadd.f32 %v660, %v291
        %v676 = vadd.f32 %v663, %v292
        %v677 = vadd.f32 %v668, %v293
        %678 = vst [vmem:[%s277] sm:$0xff] %v673
        %679 = vst [vmem:[%s277 + $0x8] sm:$0xff] %v674
        %680 = vst [vmem:[%s277 + $0x10] sm:$0xff] %v675
        %681 = vst [vmem:[%s277 + $0x18] sm:$0xff] %v676
        %682 = vst [vmem:[%s277 + $0x20] sm:$0xff] %v677
        %s683 = sand.u32 %s141, 1
        %s684 = scalar_lea.sflag [#allocation4], %s683
        %s685 = sand.u32 %s141, 1
        %s686 = smul.addr %s685, 40
        %s687 = scalar_lea.vmem [#allocation8], %s686
        // Predicated region
        $region53: #{tpu_custom_call.1} parent=39 // pred_check
          %p688 = pneg %p151
        $region54: #{tpu_custom_call.1} parent=39 // pred_check_branch
          %690 = sbr.rel (%p688) target = $region56
        $region55: #{tpu_custom_call.1} parent=39 // pred_region
          %s691 = smul.u32 5, %s23
          %s692 = ssub.s32 9, %s691
          %p693 = scmp.lt.s32.totalorder %s692, 5
          %s694 = scalar_select %p693, %s692, 5
          %s695 = smul.u32 128, %s694
          %s697 = ssub.s32 640, %s695
          %698 = vsyncadd %s684, %s697
          %p699 = scmp.ne.s32.totalorder 0, %s695
          %s700 = smul.addr %s691, 128
          %s701 = scalar_lea.hbm %s5, %s700
          %s702 = smul.u32 8, %s694
          %s703 = sshll.u32 %s687, 4
          %s704 = int_to_ptr.vmem [resolvable:$true] %s703
          %s705 = sshll.u32 %s702, 4
          %709 = dma.vmem_to_hbm [thread:$0]  (%p699), %s704, %s705, %s701, %s684, 128, 128, 8
        $region56: #{tpu_custom_call.1} parent=39 // pred_fallthru
          _
      $region40: #{tpu_custom_call.1} parent=5 // pred_fallthru
        _
      %p710 = scmp.le.s32.totalorder 2, %s18
      // Predicated region
      $region57: #{tpu_custom_call.1} parent=5 // pred_check
        %p711 = pneg %p710
      $region58: #{tpu_custom_call.1} parent=5 // pred_check_branch
        %713 = sbr.rel (%p711) target = $region60
      $region59: #{tpu_custom_call.1} parent=5 // pred_region
        %s714 = ssub.s32 %s18, 2
        // Predicated region
        $region61: #{tpu_custom_call.1} parent=59 // pred_check
          %p715 = pneg %p157
        $region62: #{tpu_custom_call.1} parent=59 // pred_check_branch
          %717 = sbr.rel (%p715) target = $region64
        $region63: #{tpu_custom_call.1} parent=59 // pred_region
          %s718 = sand.u32 %s142, 1
          %s719 = scalar_lea.sflag [#allocation4], %s718
          %s720 = sand.u32 %s142, 1
          %s721 = smul.addr %s720, 40
          %s722 = scalar_lea.vmem [#allocation8], %s721
          %723 = dma.done %s719, 640
        $region64: #{tpu_custom_call.1} parent=59 // pred_fallthru
          _
      $region60: #{tpu_custom_call.1} parent=5 // pred_fallthru
        _
    $region6: #{tpu_custom_call.1} parent=1 // loop_footer
      %s22 = sadd.s32 1, %s18
    $region7: #{tpu_custom_call.1} parent=1 // loop_footer_branch
      %17 = sbr.rel target = $region3
    $region8: #{tpu_custom_call.1} parent=1 // loop_exit
      _
    %724 = vsyncpa [#allocation3], 1
    %s725 = scalar_lea.sflag [#allocation3], 1
    %726 = vsyncpa %s725, 1
    %727 = vsyncpa [#allocation6], 1
    %728 = vsyncpa [#allocation4], 1
    %s729 = scalar_lea.sflag [#allocation4], 1
    %730 = vsyncpa %s729, 1

</llo_original>
